<compile_context>
chip_gen: v7x
topology: tpu7x:2x2x1
jax: 0.10.0
libtpu: 0.0.40
codegen_flags: <defaults>
</compile_context>

<pallas_src>
from typing import NamedTuple

import jax
import jax.numpy as jnp
from jax.experimental import pallas as pl
from jax.experimental.pallas import tpu as pltpu

_LANES = 128
_SUBLANES = 8


# --------------------------------------------------------------------------- #
# Small helpers
# --------------------------------------------------------------------------- #
def _round_up(x, m):
    return (x + m - 1) // m * m


def _vmem_capacity_bytes():
    """Per-TensorCore VMEM capacity; conservative 64 MiB fallback (v7x)."""
    try:
        cap = int(pltpu.get_tpu_info().vmem_capacity_bytes)
        if cap > 0:
            return cap
    except Exception:
        pass
    return 64 * 1024 * 1024


def _choose_block_b(batch):
    """Batch tile: big enough to fill the MXU / amortize per-step overhead,
    but >=2 tiles for mid-size batches so both v7x TensorCores get work."""
    if batch >= 1024:
        return 512
    if batch >= 512:
        return 256
    if batch >= 256:
        return 128
    if batch >= 16:
        return _round_up(pl.cdiv(batch, 2), _SUBLANES)   # guarantee >= 2 tiles
    return _round_up(max(batch, 1), _SUBLANES)


# --------------------------------------------------------------------------- #
# One-time capability probe for single-buffered (pl.Buffered(1)) blocks.
# --------------------------------------------------------------------------- #
_BUFFERED_SUPPORTED = None


def _probe_kernel(x_ref, o_ref):
    o_ref[...] = x_ref[...] + 1.0


def _buffered_supported():
    """Cached, one-time check that pl.Buffered(1) lowers and runs on this build."""
    global _BUFFERED_SUPPORTED
    if _BUFFERED_SUPPORTED is not None:
        return _BUFFERED_SUPPORTED
    supported = False
    if hasattr(pl, "Buffered"):
        try:
            spec = pl.BlockSpec((_SUBLANES, _LANES), lambda i: (0, 0),
                                pipeline_mode=pl.Buffered(1))
            f = pl.pallas_call(
                _probe_kernel,
                out_shape=jax.ShapeDtypeStruct((_SUBLANES, _LANES), jnp.float32),
                grid=(1,),
                in_specs=[spec],
                out_specs=pl.BlockSpec((_SUBLANES, _LANES), lambda i: (0, 0)),
            )
            jax.block_until_ready(f(jnp.zeros((_SUBLANES, _LANES), jnp.float32)))
            supported = True
        except Exception:
            supported = False
    _BUFFERED_SUPPORTED = supported
    return supported


# --------------------------------------------------------------------------- #
# VMEM / tiling plan
# --------------------------------------------------------------------------- #
def _plan(batch, d_in, h_p, d_out_p, block_b_hint=None):
    """Pick (block_b, hidden_tile, nk, vmem_limit_bytes, single_buffer).

    Resident-weights-first: shrink block_b before tiling the hidden dim, since
    hidden tiling re-streams W1/W2 from HBM once per batch tile.
    """
    cap = _vmem_capacity_bytes()
    plan_budget = max(24 << 20, int(cap * 0.70))    # ~90 MiB on 128 MiB parts, ~45 MiB on v7x
    limit_cap = max(32 << 20, int(cap * 0.875))     # ~112 MiB / ~56 MiB

    single_buf = _buffered_supported()
    wbuf = 1 if single_buf else 2                   # buffering of constant-index blocks

    bb0 = block_b_hint if block_b_hint is not None else _choose_block_b(batch)
    bb0 = max(_SUBLANES, _round_up(bb0, _SUBLANES))
    candidates = sorted({bb for bb in (bb0, 256, 128) if bb <= bb0}, reverse=True)

    def fixed_bytes(bb):
        return (2 * bb * d_in * 4            # f32 x tile, double buffered
                + 2 * bb * d_out_p * 4       # f32 output tile, double buffered
                + wbuf * _SUBLANES * d_out_p * 4)   # b2 (sublane-padded f32)

    # 1) Try to keep W1/W2/b1 fully resident (nk == 1), largest batch tile first.
    resident_weights = wbuf * (d_in * h_p * 2          # W1 bf16
                               + h_p * d_out_p * 2     # W2 bf16
                               + _SUBLANES * h_p * 4)  # b1 f32 (sublane-padded)
    for bb in candidates:
        est = fixed_bytes(bb) + resident_weights
        if est <= plan_budget:
            limit = min(limit_cap, max(32 << 20, int(est * 1.5) + (4 << 20)))
            return bb, h_p, 1, limit, single_buf

    # 2) Hidden-dim tiling fallback (weight blocks are pipelined -> 2x buffered).
    bb = candidates[-1]
    fixed = fixed_bytes(bb)
    per_h = 2 * (d_in * 2 + d_out_p * 2 + _SUBLANES * 4)   # W1 col + W2 row + b1
    avail = plan_budget - fixed
    n128 = h_p // _LANES
    hidden_tile = None
    for d in range(n128, 0, -1):            # multiples of 128 that divide h_p
        if n128 % d == 0 and per_h * d * _LANES <= avail:
            hidden_tile = d * _LANES
            break
    if hidden_tile is None:
        raise ValueError("SimpleNN layer does not fit the VMEM tiling plan; "
                         "reduce hidden/output dims or the batch tile.")
    nk = h_p // hidden_tile
    est = fixed + per_h * hidden_tile
    limit = min(limit_cap, max(32 << 20, int(est * 1.5) + (4 << 20)))
    return bb, hidden_tile, nk, limit, single_buf


# --------------------------------------------------------------------------- #
# Kernels
# --------------------------------------------------------------------------- #
def _mlp_kernel_resident(x_ref, w1_ref, b1_ref, w2_ref, b2_ref, o_ref):
    """relu(x @ W1 + b1) @ W2 + b2 with all weights resident. Grid = (batch tiles,)."""
    x = x_ref[...].astype(jnp.bfloat16)                       # VPU cast, hidden under MXU
    h = jnp.dot(x, w1_ref[...], preferred_element_type=jnp.float32)
    h = jnp.maximum(h + b1_ref[...], 0.0)
    o_ref[...] = (jnp.dot(h.astype(jnp.bfloat16), w2_ref[...],
                          preferred_element_type=jnp.float32)
                  + b2_ref[...]).astype(o_ref.dtype)


def _mlp_kernel_tiled(x_ref, w1_ref, b1_ref, w2_ref, b2_ref, o_ref):
    """Same math, hidden dim tiled. Grid = (batch tiles, hidden tiles).

    The output block is resident across the hidden axis (same index over k),
    so o_ref itself is the f32 accumulator — no extra scratch. ReLU is
    elementwise over hidden units, so per-hidden-tile partial sums are exact.
    """
    k = pl.program_id(1)

    @pl.when(k == 0)
    def _init():
        o_ref[...] = jnp.zeros_like(o_ref)

    x = x_ref[...].astype(jnp.bfloat16)
    h = jnp.dot(x, w1_ref[...], preferred_element_type=jnp.float32)
    h = jnp.maximum(h + b1_ref[...], 0.0)
    o_ref[...] += jnp.dot(h.astype(jnp.bfloat16), w2_ref[...],
                          preferred_element_type=jnp.float32)

    @pl.when(k == pl.num_programs(1) - 1)
    def _finalize():
        o_ref[...] += b2_ref[...]


# --------------------------------------------------------------------------- #
# pallas_call wrapper
# --------------------------------------------------------------------------- #
def _forward_impl(x, w1, b1, w2, b2, *, block_b, hidden_tile, nk,
                  vmem_limit_bytes, single_buffer):
    b_p, d_in = x.shape
    h_p = w1.shape[1]
    d_out_p = w2.shape[1]
    nb = b_p // block_b

    def const_spec(shape, index_map):
        # Constant-index (fully resident) blocks don't need double buffering.
        if single_buffer:
            return pl.BlockSpec(shape, index_map, pipeline_mode=pl.Buffered(1))
        return pl.BlockSpec(shape, index_map)

    if nk == 1:
        grid = (nb,)
        in_specs = [
            pl.BlockSpec((block_b, d_in), lambda i: (i, 0)),       # x tile (f32)
            const_spec((d_in, h_p), lambda i: (0, 0)),             # W1 (bf16, resident)
            const_spec((1, h_p), lambda i: (0, 0)),                # b1 (f32)
            const_spec((h_p, d_out_p), lambda i: (0, 0)),          # W2 (bf16, resident)
            const_spec((1, d_out_p), lambda i: (0, 0)),            # b2 (f32)
        ]
        out_specs = pl.BlockSpec((block_b, d_out_p), lambda i: (i, 0))
        kernel = _mlp_kernel_resident
        dims = ("parallel",)
    else:
        grid = (nb, nk)
        in_specs = [
            pl.BlockSpec((block_b, d_in), lambda i, k: (i, 0)),
            pl.BlockSpec((d_in, hidden_tile), lambda i, k: (0, k)),
            pl.BlockSpec((1, hidden_tile), lambda i, k: (0, k)),
            pl.BlockSpec((hidden_tile, d_out_p), lambda i, k: (k, 0)),
            const_spec((1, d_out_p), lambda i, k: (0, 0)),
        ]
        out_specs = pl.BlockSpec((block_b, d_out_p), lambda i, k: (i, 0))
        kernel = _mlp_kernel_tiled
        dims = ("parallel", "arbitrary")

    return pl.pallas_call(
        kernel,
        out_shape=jax.ShapeDtypeStruct((b_p, d_out_p), jnp.float32),
        grid=grid,
        in_specs=in_specs,
        out_specs=out_specs,
        compiler_params=pltpu.CompilerParams(
            dimension_semantics=dims,
            vmem_limit_bytes=vmem_limit_bytes),
    )(x, w1, b1, w2, b2)


_forward_jit = jax.jit(
    _forward_impl,
    static_argnames=("block_b", "hidden_tile", "nk", "vmem_limit_bytes",
                     "single_buffer"))


# --------------------------------------------------------------------------- #
# Public API
# --------------------------------------------------------------------------- #
class PreparedParams(NamedTuple):
    w1: jax.Array   # (d_in, h_p)    bf16
    b1: jax.Array   # (1,   h_p)     f32
    w2: jax.Array   # (h_p, d_out_p) bf16
    b2: jax.Array   # (1,   d_out_p) f32
    d_in: int
    hidden: int
    d_out: int


def prepare_params(w1, b1, w2, b2):
    """One-time pad (hidden/output -> multiples of 128) + bf16 cast of the weights.

    Zero-padding is exact: relu(0 + 0) = 0 and the padded W2 rows/cols are zero.
    Weights are in (in, out) layout so the kernel hot path has no transposes.
    """
    d_in, hidden = w1.shape
    d_out = w2.shape[1]
    h_p = _round_up(hidden, _LANES)
    d_out_p = _round_up(d_out, _LANES)           # lane-dense output -> full vst stores
    w1_p = jnp.pad(w1, ((0, 0), (0, h_p - hidden))).astype(jnp.bfloat16)
    b1_p = jnp.pad(b1.reshape(1, -1), ((0, 0), (0, h_p - hidden))).astype(jnp.float32)
    w2_p = jnp.pad(w2, ((0, h_p - hidden), (0, d_out_p - d_out))).astype(jnp.bfloat16)
    b2_p = jnp.pad(b2.reshape(1, -1), ((0, 0), (0, d_out_p - d_out))).astype(jnp.float32)
    return PreparedParams(w1_p, b1_p, w2_p, b2_p, int(d_in), int(hidden), int(d_out))


def simple_nn_forward(x, params: PreparedParams, *, block_b=None):
    """relu(x @ W1 + b1) @ W2 + b2 with PyTorch nn.Linear semantics.

    x: (B, input_dim) f32. Matmuls run in bf16 on the MXU with f32 accumulation.
    """
    B, d_in = x.shape
    assert d_in == params.d_in, (d_in, params.d_in)
    h_p = params.w1.shape[1]
    d_out_p = params.w2.shape[1]

    bb, hidden_tile, nk, vmem_limit, single_buf = _plan(
        B, d_in, h_p, d_out_p, block_b)

    b_p = _round_up(B, bb)
    x_p = x.astype(jnp.float32)
    if b_p != B:                                 # pad batch rows only; x stays f32
        x_p = jnp.pad(x_p, ((0, b_p - B), (0, 0)))

    out = _forward_jit(x_p, params.w1, params.b1, params.w2, params.b2,
                       block_b=bb, hidden_tile=hidden_tile, nk=nk,
                       vmem_limit_bytes=vmem_limit, single_buffer=single_buf)
    return out[:B, :params.d_out]


def init_params(key, input_dim, hidden_dim, output_dim):
    """Matches nn.Linear default init (uniform +/- 1/sqrt(fan_in)); (in, out) layout."""
    k1, k2, k3, k4 = jax.random.split(key, 4)
    bound1 = 1.0 / jnp.sqrt(jnp.float32(input_dim))
    bound2 = 1.0 / jnp.sqrt(jnp.float32(hidden_dim))
    w1 = jax.random.uniform(k1, (input_dim, hidden_dim), jnp.float32, -bound1, bound1)
    b1 = jax.random.uniform(k2, (hidden_dim,), jnp.float32, -bound1, bound1)
    w2 = jax.random.uniform(k3, (hidden_dim, output_dim), jnp.float32, -bound2, bound2)
    b2 = jax.random.uniform(k4, (output_dim,), jnp.float32, -bound2, bound2)
    return w1, b1, w2, b2


if __name__ == "__main__":
    # Small shapes consistent with the module: batch=8, input_dim=32,
    # hidden_dim=64, output_dim=16.
    B, D_IN, H, D_OUT = 8, 32, 64, 16

    key = jax.random.PRNGKey(0)
    kx, kp = jax.random.split(key)
    x = jax.random.normal(kx, (B, D_IN), jnp.float32)
    w1, b1, w2, b2 = init_params(kp, D_IN, H, D_OUT)

    params = prepare_params(w1, b1, w2, b2)      # one-time pad + bf16 cast
    out = simple_nn_forward(x, params)
    out = jax.block_until_ready(out)

    # Pure-JAX f32 reference (PyTorch-module semantics). The kernel runs its
    # matmuls in bf16 with f32 accumulation -> compare at bf16-level tolerance.
    ref = jnp.maximum(x @ w1 + b1[None, :], 0.0) @ w2 + b2[None, :]
    assert out.shape == (B, D_OUT)
    assert jnp.allclose(out, ref, atol=3e-2, rtol=3e-2), (
        float(jnp.max(jnp.abs(out - ref))))

    print("KERNEL_OK")
</pallas_src>

<mosaic_0001>
module attributes {stable_mosaic.version = 11 : i64} {
  func.func @_probe_kernel(%arg0: i32, %arg1: memref<8x128xf32, #tpu.memory_space<vmem>>, %arg2: memref<8x128xf32, #tpu.memory_space<vmem>>) attributes {dimension_semantics = [#tpu.dimension_semantics<arbitrary>], iteration_bounds = array<i64: 1>, scalar_prefetch = 0 : i64, scratch_operands = 0 : i64, tpu.core_type = #tpu.core_type<tc>, window_params = [{pipeline_mode = #tpu.pipeline_mode<synchronous>, transform_indices = @transform_0, window_bounds = array<i64: 8, 128>}, {pipeline_mode = #tpu.pipeline_mode<synchronous>, transform_indices = @transform_1, window_bounds = array<i64: 8, 128>}]} {
    %c0 = arith.constant 0 : index
    %c0_0 = arith.constant 0 : index
    %0 = vector.load %arg1[%c0, %c0_0] : memref<8x128xf32, #tpu.memory_space<vmem>>, vector<8x128xf32>
    %cst = arith.constant 1.000000e+00 : f32
    %1 = vector.broadcast %cst : f32 to vector<8x128xf32>
    %2 = arith.addf %0, %1 : vector<8x128xf32>
    %c0_1 = arith.constant 0 : index
    %c0_2 = arith.constant 0 : index
    %3 = vector.load %arg2[%c0_1, %c0_2] : memref<8x128xf32, #tpu.memory_space<vmem>>, vector<8x128xf32>
    tpu.vector_store %arg2[%c0_1, %c0_2], %2 {strides = array<i32>} : memref<8x128xf32, #tpu.memory_space<vmem>>, vector<8x128xf32>,
    return
  }
  func.func @transform_0(%arg0: i32) -> (i32, i32) {
    %c0_i32 = arith.constant 0 : i32
    %c0_i32_0 = arith.constant 0 : i32
    %c0_i32_1 = arith.constant 0 : i32
    return %c0_i32, %c0_i32_0 : i32, i32
  }
  func.func @transform_1(%arg0: i32) -> (i32, i32) {
    %c0_i32 = arith.constant 0 : i32
    %c0_i32_0 = arith.constant 0 : i32
    %c0_i32_1 = arith.constant 0 : i32
    return %c0_i32, %c0_i32_0 : i32, i32
  }
}

module attributes {stable_mosaic.version = 11 : i64} {
  func.func @_mlp_kernel_resident(%arg0: i32, %arg1: memref<8x32xf32, #tpu.memory_space<vmem>>, %arg2: memref<32x128xbf16, #tpu.memory_space<vmem>>, %arg3: memref<1x128xf32, #tpu.memory_space<vmem>>, %arg4: memref<128x128xbf16, #tpu.memory_space<vmem>>, %arg5: memref<1x128xf32, #tpu.memory_space<vmem>>, %arg6: memref<8x128xf32, #tpu.memory_space<vmem>>) attributes {dimension_semantics = [#tpu.dimension_semantics<parallel>], iteration_bounds = array<i64: 1>, scalar_prefetch = 0 : i64, scratch_operands = 0 : i64, tpu.core_type = #tpu.core_type<tc>, window_params = [{transform_indices = @transform_0, window_bounds = array<i64: 8, 32>}, {pipeline_mode = #tpu.pipeline_mode<synchronous>, transform_indices = @transform_1, window_bounds = array<i64: 32, 128>}, {pipeline_mode = #tpu.pipeline_mode<synchronous>, transform_indices = @transform_2, window_bounds = array<i64: 1, 128>}, {pipeline_mode = #tpu.pipeline_mode<synchronous>, transform_indices = @transform_3, window_bounds = array<i64: 128, 128>}, {pipeline_mode = #tpu.pipeline_mode<synchronous>, transform_indices = @transform_4, window_bounds = array<i64: 1, 128>}, {transform_indices = @transform_5, window_bounds = array<i64: 8, 128>}]} {
    %c0 = arith.constant 0 : index
    %c0_0 = arith.constant 0 : index
    %0 = vector.load %arg1[%c0, %c0_0] : memref<8x32xf32, #tpu.memory_space<vmem>>, vector<8x32xf32>
    %1 = arith.truncf %0 : vector<8x32xf32> to vector<8x32xbf16>
    %c0_1 = arith.constant 0 : index
    %c0_2 = arith.constant 0 : index
    %2 = vector.load %arg2[%c0_1, %c0_2] : memref<32x128xbf16, #tpu.memory_space<vmem>>, vector<32x128xbf16>
    %cst = arith.constant dense<0.000000e+00> : vector<8x128xf32>
    %3 = tpu.matmul %1, %2, %cst {dimension_numbers = #tpu.dot_dimension_numbers<[1], [0], [0], [1], [0, 0, 1, 1], [], []>} : vector<8x32xbf16>, vector<32x128xbf16>, vector<8x128xf32> -> vector<8x128xf32>
    %c0_3 = arith.constant 0 : index
    %c0_4 = arith.constant 0 : index
    %4 = vector.load %arg3[%c0_3, %c0_4] : memref<1x128xf32, #tpu.memory_space<vmem>>, vector<1x128xf32>
    %5 = vector.broadcast %4 : vector<1x128xf32> to vector<8x128xf32>
    %6 = arith.addf %3, %5 : vector<8x128xf32>
    %cst_5 = arith.constant 0.000000e+00 : f32
    %7 = vector.broadcast %cst_5 : f32 to vector<8x128xf32>
    %8 = arith.maximumf %6, %7 : vector<8x128xf32>
    %9 = arith.truncf %8 : vector<8x128xf32> to vector<8x128xbf16>
    %c0_6 = arith.constant 0 : index
    %c0_7 = arith.constant 0 : index
    %10 = vector.load %arg4[%c0_6, %c0_7] : memref<128x128xbf16, #tpu.memory_space<vmem>>, vector<128x128xbf16>
    %cst_8 = arith.constant dense<0.000000e+00> : vector<8x128xf32>
    %11 = tpu.matmul %9, %10, %cst_8 {dimension_numbers = #tpu.dot_dimension_numbers<[1], [0], [0], [1], [0, 0, 1, 1], [], []>} : vector<8x128xbf16>, vector<128x128xbf16>, vector<8x128xf32> -> vector<8x128xf32>
    %c0_9 = arith.constant 0 : index
    %c0_10 = arith.constant 0 : index
    %12 = vector.load %arg5[%c0_9, %c0_10] : memref<1x128xf32, #tpu.memory_space<vmem>>, vector<1x128xf32>
    %13 = vector.broadcast %12 : vector<1x128xf32> to vector<8x128xf32>
    %14 = arith.addf %11, %13 : vector<8x128xf32>
    %c0_11 = arith.constant 0 : index
    %c0_12 = arith.constant 0 : index
    %15 = vector.load %arg6[%c0_11, %c0_12] : memref<8x128xf32, #tpu.memory_space<vmem>>, vector<8x128xf32>
    tpu.vector_store %arg6[%c0_11, %c0_12], %14 {strides = array<i32>} : memref<8x128xf32, #tpu.memory_space<vmem>>, vector<8x128xf32>,
    return
  }
  func.func @transform_0(%arg0: i32) -> (i32, i32) {
    %c0_i32 = arith.constant 0 : i32
    %c0_i32_0 = arith.constant 0 : i32
    return %arg0, %c0_i32 : i32, i32
  }
  func.func @transform_1(%arg0: i32) -> (i32, i32) {
    %c0_i32 = arith.constant 0 : i32
    %c0_i32_0 = arith.constant 0 : i32
    %c0_i32_1 = arith.constant 0 : i32
    return %c0_i32, %c0_i32_0 : i32, i32
  }
  func.func @transform_2(%arg0: i32) -> (i32, i32) {
    %c0_i32 = arith.constant 0 : i32
    %c0_i32_0 = arith.constant 0 : i32
    %c0_i32_1 = arith.constant 0 : i32
    return %c0_i32, %c0_i32_0 : i32, i32
  }
  func.func @transform_3(%arg0: i32) -> (i32, i32) {
    %c0_i32 = arith.constant 0 : i32
    %c0_i32_0 = arith.constant 0 : i32
    %c0_i32_1 = arith.constant 0 : i32
    return %c0_i32, %c0_i32_0 : i32, i32
  }
  func.func @transform_4(%arg0: i32) -> (i32, i32) {
    %c0_i32 = arith.constant 0 : i32
    %c0_i32_0 = arith.constant 0 : i32
    %c0_i32_1 = arith.constant 0 : i32
    return %c0_i32, %c0_i32_0 : i32, i32
  }
  func.func @transform_5(%arg0: i32) -> (i32, i32) {
    %c0_i32 = arith.constant 0 : i32
    %c0_i32_0 = arith.constant 0 : i32
    return %arg0, %c0_i32 : i32, i32
  }
}

</mosaic_0001>

<llo_original>
// kernel: tpu_custom_call.1
$region0: #{tpu_custom_call.1}
  #allocation0 [shape = 'u32[]', space=smem, size = 0x4, offset = 0x4, fixed_abs, tag = 'smem constant byte address 0x4 - core index']
  #allocation1 [shape = 'u32[144,128]{1,0:T(1,128)}', space=vmem, size = 0x12000, scoped, tag = 'internal scratch']
  %s0 = inlined_call_operand.hbm [shape: f32[8,128], index: 0, kind: input, shape index: {}]
  %s1 = inlined_call_operand.hbm [shape: f32[8,128], index: 1, kind: output, shape index: {}]
  %s2 = sld [smem:[#allocation0]]
  $region18: #{tpu_custom_call.1} parent=0
    _
  %s4 = ssub.s32 1, %s2
  %s5 = scalar_select 0, %s4, %s2
  $region1: #{tpu_custom_call.1} parent=0
    #allocation2 [shape = 'u8[4096]{0}', space=vmem, size = 0x1000, scoped, tag = 'input window, operand 0, single buffered']
    #allocation3 [shape = 's32[1]{0}', space=sflag, size = 0x4, scoped, tag = 'scoped memory for tpu_custom_call.1']
    #allocation4 [shape = 's32[1]{0}', space=sflag, size = 0x4, scoped, tag = 'scoped memory for tpu_custom_call.1']
    #allocation5 [shape = 'u8[4096]{0}', space=vmem, size = 0x1000, scoped, tag = 'output window, operand 0, single buffered']
    %6 = vsyncpa [#allocation3], 0
    %7 = vsyncpa [#allocation4], 0
    // Predicated region
    $region2: #{tpu_custom_call.1} parent=1 // pred_check
      _
    $region3: #{tpu_custom_call.1} parent=1 // pred_check_branch
      %9 = sbr.rel (0) target = $region5
    $region4: #{tpu_custom_call.1} parent=1 // pred_region
      %s11 = ssub.s32 128, 128
      %12 = vsyncadd [#allocation3], %s11
      %s14 = sshll.u32 [#allocation2], 4
      %s15 = int_to_ptr.vmem [resolvable:$true] %s14
      %17 = dma.hbm_to_vmem [thread:$0]  %s0, 128, %s15, [#allocation3]
    $region5: #{tpu_custom_call.1} parent=1 // pred_fallthru
      _
    // Predicated region
    $region6: #{tpu_custom_call.1} parent=1 // pred_check
      _
    $region7: #{tpu_custom_call.1} parent=1 // pred_check_branch
      %19 = sbr.rel (0) target = $region9
    $region8: #{tpu_custom_call.1} parent=1 // pred_region
      %20 = dma.done [#allocation3], 128
    $region9: #{tpu_custom_call.1} parent=1 // pred_fallthru
      _
    %v21 = vld [vmem:[#allocation2] sm:$0xff]
    %v22 = vadd.f32 %v21, 1.0
    %23 = vst [vmem:[#allocation5] sm:$0xff] %v22
    // Predicated region
    $region10: #{tpu_custom_call.1} parent=1 // pred_check
      _
    $region11: #{tpu_custom_call.1} parent=1 // pred_check_branch
      %25 = sbr.rel (0) target = $region13
    $region12: #{tpu_custom_call.1} parent=1 // pred_region
      %s27 = ssub.s32 128, 128
      %28 = vsyncadd [#allocation4], %s27
      %s30 = sshll.u32 [#allocation5], 4
      %s31 = int_to_ptr.vmem [resolvable:$true] %s30
      %33 = dma.vmem_to_hbm [thread:$0]  %s31, 128, %s1, [#allocation4]
    $region13: #{tpu_custom_call.1} parent=1 // pred_fallthru
      _
    // Predicated region
    $region14: #{tpu_custom_call.1} parent=1 // pred_check
      _
    $region15: #{tpu_custom_call.1} parent=1 // pred_check_branch
      %35 = sbr.rel (0) target = $region17
    $region16: #{tpu_custom_call.1} parent=1 // pred_region
      %36 = dma.done [#allocation4], 128
    $region17: #{tpu_custom_call.1} parent=1 // pred_fallthru
      _
    %37 = vsyncpa [#allocation3], 1
    %38 = vsyncpa [#allocation4], 1

// kernel: _forward_impl.1
$region0: #{_forward_impl.1}
  #allocation0 [shape = 'u32[]', space=smem, size = 0x4, offset = 0x4, fixed_abs, tag = 'smem constant byte address 0x4 - core index']
  #allocation1 [shape = 'u32[144,128]{1,0:T(1,128)}', space=vmem, size = 0x12000, scoped, tag = 'internal scratch']
  %s0 = inlined_call_operand.hbm [shape: f32[8,32], index: 0, kind: input, shape index: {}]
  %s1 = inlined_call_operand.hbm [shape: bf16[32,128], index: 1, kind: input, shape index: {}]
  %s2 = inlined_call_operand.vmem [shape: f32[1,128], index: 2, kind: input, shape index: {}]
  %s3 = inlined_call_operand.hbm [shape: bf16[128,128], index: 3, kind: input, shape index: {}]
  %s4 = inlined_call_operand.vmem [shape: f32[1,128], index: 4, kind: input, shape index: {}]
  %s5 = inlined_call_operand.hbm [shape: f32[8,128], index: 5, kind: output, shape index: {}]
  %s6 = sld [smem:[#allocation0]]
  $region42: #{_forward_impl.1} parent=0
    _
  %s8 = ssub.s32 1, %s6
  %s9 = scalar_select 0, %s8, %s6
  $region1: #{_forward_impl.1} parent=0
    #allocation2 [shape = 'u8[4096]{0}', space=vmem, size = 0x1000, scoped, tag = 'input window, operand 0, single buffered']
    #allocation3 [shape = 's32[1]{0}', space=sflag, size = 0x4, scoped, tag = 'scoped memory for _forward_impl.1']
    #allocation4 [shape = 's32[1]{0}', space=sflag, size = 0x4, scoped, tag = 'scoped memory for _forward_impl.1']
    #allocation5 [shape = 'u8[8192]{0}', space=vmem, size = 0x2000, scoped, tag = 'input window, operand 1, single buffered']
    #allocation6 [shape = 's32[1]{0}', space=sflag, size = 0x4, scoped, tag = 'scoped memory for _forward_impl.1']
    #allocation7 [shape = 'u8[32768]{0}', space=vmem, size = 0x8000, scoped, tag = 'input window, operand 3, single buffered']
    #allocation8 [shape = 'u8[4096]{0}', space=vmem, size = 0x1000, scoped, tag = 'output window, operand 0, single buffered']
    %10 = vsyncpa [#allocation3], 0
    %11 = vsyncpa [#allocation6], 0
    %12 = vsyncpa [#allocation4], 0
    // Predicated region
    $region2: #{_forward_impl.1} parent=1 // pred_check
      _
    $region3: #{_forward_impl.1} parent=1 // pred_check_branch
      %14 = sbr.rel (0) target = $region5
    $region4: #{_forward_impl.1} parent=1 // pred_region
      %s16 = ssub.s32 128, 128
      %17 = vsyncadd [#allocation3], %s16
      %s19 = sshll.u32 [#allocation2], 4
      %s20 = int_to_ptr.vmem [resolvable:$true] %s19
      %22 = dma.hbm_to_vmem [thread:$0]  %s0, 128, %s20, [#allocation3]
    $region5: #{_forward_impl.1} parent=1 // pred_fallthru
      _
    // Predicated region
    $region6: #{_forward_impl.1} parent=1 // pred_check
      _
    $region7: #{_forward_impl.1} parent=1 // pred_check_branch
      %24 = sbr.rel (0) target = $region9
    $region8: #{_forward_impl.1} parent=1 // pred_region
      %s26 = ssub.s32 256, 256
      %27 = vsyncadd [#allocation6], %s26
      %s28 = sshll.u32 [#allocation5], 4
      %s29 = int_to_ptr.vmem [resolvable:$true] %s28
      %34 = dma.hbm_to_vmem [thread:$0]  %s1, 256, %s29, [#allocation6], 64, 64, 4
    $region9: #{_forward_impl.1} parent=1 // pred_fallthru
      _
    // Predicated region
    $region10: #{_forward_impl.1} parent=1 // pred_check
      _
    $region11: #{_forward_impl.1} parent=1 // pred_check_branch
      %36 = sbr.rel (0) target = $region13
    $region12: #{_forward_impl.1} parent=1 // pred_region
      _
    $region13: #{_forward_impl.1} parent=1 // pred_fallthru
      _
    // Predicated region
    $region14: #{_forward_impl.1} parent=1 // pred_check
      _
    $region15: #{_forward_impl.1} parent=1 // pred_check_branch
      %38 = sbr.rel (0) target = $region17
    $region16: #{_forward_impl.1} parent=1 // pred_region
      %s40 = ssub.s32 1024, 1024
      %41 = vsyncadd [#allocation6], %s40
      %s42 = sshll.u32 [#allocation7], 4
      %s43 = int_to_ptr.vmem [resolvable:$true] %s42
      %48 = dma.hbm_to_vmem [thread:$0]  %s3, 1024, %s43, [#allocation6], 64, 64, 4
    $region17: #{_forward_impl.1} parent=1 // pred_fallthru
      _
    // Predicated region
    $region18: #{_forward_impl.1} parent=1 // pred_check
      _
    $region19: #{_forward_impl.1} parent=1 // pred_check_branch
      %50 = sbr.rel (0) target = $region21
    $region20: #{_forward_impl.1} parent=1 // pred_region
      _
    $region21: #{_forward_impl.1} parent=1 // pred_fallthru
      _
    // Predicated region
    $region22: #{_forward_impl.1} parent=1 // pred_check
      _
    $region23: #{_forward_impl.1} parent=1 // pred_check_branch
      %52 = sbr.rel (0) target = $region25
    $region24: #{_forward_impl.1} parent=1 // pred_region
      %53 = dma.done [#allocation3], 128
    $region25: #{_forward_impl.1} parent=1 // pred_fallthru
      _
    // Predicated region
    $region26: #{_forward_impl.1} parent=1 // pred_check
      _
    $region27: #{_forward_impl.1} parent=1 // pred_check_branch
      %55 = sbr.rel (0) target = $region29
    $region28: #{_forward_impl.1} parent=1 // pred_region
      %56 = dma.done [#allocation6], 256
    $region29: #{_forward_impl.1} parent=1 // pred_fallthru
      _
    // Predicated region
    $region30: #{_forward_impl.1} parent=1 // pred_check
      _
    $region31: #{_forward_impl.1} parent=1 // pred_check_branch
      %58 = sbr.rel (0) target = $region33
    $region32: #{_forward_impl.1} parent=1 // pred_region
      %59 = dma.done [#allocation6], 1024
    $region33: #{_forward_impl.1} parent=1 // pred_fallthru
      _
    %v61 = vld [vmem:[#allocation2] sm:$0xff]
    %v62 = vpack.c.bf16 %v61, %v61
    %v63 = vld [vmem:[#allocation5] sm:$0xf]
    %v64 = vld [vmem:[#allocation5 + $0x4] sm:$0xf]
    %v65 = vld [vmem:[#allocation5 + $0x8] sm:$0xf]
    %v66 = vld [vmem:[#allocation5 + $0xc] sm:$0xf]
    %v67 = vld [vmem:[%s2] sm:$0x1]
    %v69 = vlaneseq
    %v70 = vshrl.u32 %v69, 7
    %v71 = vsub.s32 0, %v70
    %v72 = vrot.slane %v67, %v71
    %v78 = vunpack.c.l.b16 %v63
    %v79 = vunpack.c.l.b16 %v64
    %v80 = vunpack.c.l.b16 %v65
    %v81 = vunpack.c.l.b16 %v66
    %v82 = vpack.c.b16 %v79, %v78
    %v83 = vpack.c.b16 %v81, %v80
    %vm86 = vcmask 261120
    %v88 = vsel %vm86, %v62, 0
    %90 = vmatprep.subr.bf16.mxu0 0
    %91 = vmatpush1.bf16.msra.mxu0 %v82
    %92 = vmatprep.subr.bf16.mxu0 0
    %93 = vmatpush1.bf16.msra.mxu0 %v83
    %94 = vmatprep.subr.bf16.mxu0 0
    %95 = vmatpush1.bf16.msra.mxu0 0
    %96 = vmatprep.subr.bf16.mxu0 0
    %97 = vmatpush1.bf16.msra.mxu0 0
    %98 = vmatprep.subr.bf16.mxu0 0
    %99 = vmatpush1.bf16.msra.mxu0 0
    %100 = vmatprep.subr.bf16.mxu0 0
    %101 = vmatpush1.bf16.msra.mxu0 0
    %102 = vmatprep.subr.bf16.mxu0 0
    %103 = vmatpush1.bf16.msra.mxu0 0
    %104 = vmatprep.subr.bf16.mxu0 0
    %105 = vmatpush1.bf16.msra.mxu0 0
    %106 = vmatprep.subr.bf16.mxu0 0
    %107 = vmatpush1.bf16.msra.mxu0 0
    %108 = vmatprep.subr.bf16.mxu0 0
    %109 = vmatpush1.bf16.msra.mxu0 0
    %110 = vmatprep.subr.bf16.mxu0 0
    %111 = vmatpush1.bf16.msra.mxu0 0
    %112 = vmatprep.subr.bf16.mxu0 0
    %113 = vmatpush1.bf16.msra.mxu0 0
    %114 = vmatprep.subr.bf16.mxu0 0
    %115 = vmatpush1.bf16.msra.mxu0 0
    %116 = vmatprep.subr.bf16.mxu0 0
    %117 = vmatpush1.bf16.msra.mxu0 0
    %118 = vmatprep.subr.bf16.mxu0 0
    %119 = vmatpush1.bf16.msra.mxu0 0
    %120 = vmatprep.subr.bf16.mxu0 0
    %121 = vmatpush1.bf16.msra.mxu0 0
    %122 = vmatprep.mubr.bf16.mxu0 0
    %123 = vmatmul.mubr.bf16.gmra.mrb[0].mxu0 %v88
    %v124 = vpop.f32.mrb[0].mxu0
    %v125 = vadd.f32 %v72, %v124
    %v126 = vpop.f32.mrb[0].mxu0
    %v127 = vpop.f32.mrb[0].mxu0
    %v128 = vpop.f32.mrb[0].mxu0
    %129 = vdwg.mxu0
    %v130 = vmax.f32 %v125, 0.0
    %v131 = vpack.c.bf16 %v130, %v130
    %v132 = vld [vmem:[#allocation7] sm:$0xf]
    %v133 = vld [vmem:[#allocation7 + $0x4] sm:$0xf]
    %v134 = vld [vmem:[#allocation7 + $0x8] sm:$0xf]
    %v135 = vld [vmem:[#allocation7 + $0xc] sm:$0xf]
    %v136 = vld [vmem:[#allocation7 + $0x10] sm:$0xf]
    %v137 = vld [vmem:[#allocation7 + $0x14] sm:$0xf]
    %v138 = vld [vmem:[#allocation7 + $0x18] sm:$0xf]
    %v139 = vld [vmem:[#allocation7 + $0x1c] sm:$0xf]
    %v140 = vld [vmem:[#allocation7 + $0x20] sm:$0xf]
    %v141 = vld [vmem:[#allocation7 + $0x24] sm:$0xf]
    %v142 = vld [vmem:[#allocation7 + $0x28] sm:$0xf]
    %v143 = vld [vmem:[#allocation7 + $0x2c] sm:$0xf]
    %v144 = vld [vmem:[#allocation7 + $0x30] sm:$0xf]
    %v145 = vld [vmem:[#allocation7 + $0x34] sm:$0xf]
    %v146 = vld [vmem:[#allocation7 + $0x38] sm:$0xf]
    %v147 = vld [vmem:[#allocation7 + $0x3c] sm:$0xf]
    %v148 = vld [vmem:[%s4] sm:$0x1]
    %v150 = vlaneseq
    %v151 = vshrl.u32 %v150, 7
    %v152 = vsub.s32 0, %v151
    %v153 = vrot.slane %v148, %v152
    %v171 = vunpack.c.l.b16 %v132
    %v172 = vunpack.c.l.b16 %v133
    %v173 = vunpack.c.l.b16 %v134
    %v174 = vunpack.c.l.b16 %v135
    %v175 = vunpack.c.l.b16 %v136
    %v176 = vunpack.c.l.b16 %v137
    %v177 = vunpack.c.l.b16 %v138
    %v178 = vunpack.c.l.b16 %v139
    %v179 = vunpack.c.l.b16 %v140
    %v180 = vunpack.c.l.b16 %v141
    %v181 = vunpack.c.l.b16 %v142
    %v182 = vunpack.c.l.b16 %v143
    %v183 = vunpack.c.l.b16 %v144
    %v184 = vunpack.c.l.b16 %v145
    %v185 = vunpack.c.l.b16 %v146
    %v186 = vunpack.c.l.b16 %v147
    %v187 = vpack.c.b16 %v172, %v171
    %v188 = vpack.c.b16 %v174, %v173
    %v189 = vpack.c.b16 %v176, %v175
    %v190 = vpack.c.b16 %v178, %v177
    %v191 = vpack.c.b16 %v180, %v179
    %v192 = vpack.c.b16 %v182, %v181
    %v193 = vpack.c.b16 %v184, %v183
    %v194 = vpack.c.b16 %v186, %v185
    %203 = vmatprep.subr.bf16.mxu0 0
    %204 = vmatpush1.bf16.msra.mxu0 %v187
    %205 = vmatprep.subr.bf16.mxu0 0
    %206 = vmatpush1.bf16.msra.mxu0 %v188
    %207 = vmatprep.subr.bf16.mxu0 0
    %208 = vmatpush1.bf16.msra.mxu0 %v189
    %209 = vmatprep.subr.bf16.mxu0 0
    %210 = vmatpush1.bf16.msra.mxu0 %v190
    %211 = vmatprep.subr.bf16.mxu0 0
    %212 = vmatpush1.bf16.msra.mxu0 %v191
    %213 = vmatprep.subr.bf16.mxu0 0
    %214 = vmatpush1.bf16.msra.mxu0 %v192
    %215 = vmatprep.subr.bf16.mxu0 0
    %216 = vmatpush1.bf16.msra.mxu0 %v193
    %217 = vmatprep.subr.bf16.mxu0 0
    %218 = vmatpush1.bf16.msra.mxu0 %v194
    %219 = vmatprep.subr.bf16.mxu0 0
    %220 = vmatpush1.bf16.msra.mxu0 0
    %221 = vmatprep.subr.bf16.mxu0 0
    %222 = vmatpush1.bf16.msra.mxu0 0
    %223 = vmatprep.subr.bf16.mxu0 0
    %224 = vmatpush1.bf16.msra.mxu0 0
    %225 = vmatprep.subr.bf16.mxu0 0
    %226 = vmatpush1.bf16.msra.mxu0 0
    %227 = vmatprep.subr.bf16.mxu0 0
    %228 = vmatpush1.bf16.msra.mxu0 0
    %229 = vmatprep.subr.bf16.mxu0 0
    %230 = vmatpush1.bf16.msra.mxu0 0
    %231 = vmatprep.subr.bf16.mxu0 0
    %232 = vmatpush1.bf16.msra.mxu0 0
    %233 = vmatprep.subr.bf16.mxu0 0
    %234 = vmatpush1.bf16.msra.mxu0 0
    %235 = vmatprep.mubr.bf16.mxu0 0
    %236 = vmatmul.mubr.bf16.gmra.mrb[0].mxu0 %v131
    %v237 = vpop.f32.mrb[0].mxu0
    %v238 = vadd.f32 %v153, %v237
    %v239 = vpop.f32.mrb[0].mxu0
    %v240 = vpop.f32.mrb[0].mxu0
    %v241 = vpop.f32.mrb[0].mxu0
    %242 = vdwg.mxu0
    %243 = vst [vmem:[#allocation8] sm:$0xff] %v238
    // Predicated region
    $region34: #{_forward_impl.1} parent=1 // pred_check
      _
    $region35: #{_forward_impl.1} parent=1 // pred_check_branch
      %245 = sbr.rel (0) target = $region37
    $region36: #{_forward_impl.1} parent=1 // pred_region
      %s247 = ssub.s32 128, 128
      %248 = vsyncadd [#allocation4], %s247
      %s250 = sshll.u32 [#allocation8], 4
      %s251 = int_to_ptr.vmem [resolvable:$true] %s250
      %253 = dma.vmem_to_hbm [thread:$0]  %s251, 128, %s5, [#allocation4]
    $region37: #{_forward_impl.1} parent=1 // pred_fallthru
      _
    // Predicated region
    $region38: #{_forward_impl.1} parent=1 // pred_check
      _
    $region39: #{_forward_impl.1} parent=1 // pred_check_branch
      %255 = sbr.rel (0) target = $region41
    $region40: #{_forward_impl.1} parent=1 // pred_region
      %256 = dma.done [#allocation4], 128
    $region41: #{_forward_impl.1} parent=1 // pred_fallthru
      _
    %257 = vsyncpa [#allocation3], 1
    %258 = vsyncpa [#allocation6], 1
    %259 = vsyncpa [#allocation4], 1

</llo_original>
